<compile_context>
chip_gen: v5e
topology: v5e:2x2
jax: 0.10.0
libtpu: 0.0.40
codegen_flags: <defaults>
</compile_context>

<pallas_src>
import jax
import jax.numpy as jnp
from jax.experimental import pallas as pl
from jax.experimental.pallas import tpu as pltpu


# ----------------------------------------------------------------------------
# Helpers
# ----------------------------------------------------------------------------
def _round_up(x, m):
    return ((x + m - 1) // m) * m


def _cdiv(a, b):
    return (a + b - 1) // b


def _split_dim(dim, target, base):
    """Split `dim` into nb equal-ish blocks of size t (t aligned to `base`,
    t * nb >= dim).  The dim is padded UP to t * nb, so we never fall back to
    tiny divisor tiles for awkward sizes."""
    target = max(base, (target // base) * base)
    nb = max(1, _cdiv(dim, target))
    t = _round_up(_cdiv(dim, nb), base)
    return t, nb, t * nb


def _vmem_budget():
    """(tile-footprint budget bytes, scoped-vmem limit bytes) derived from the
    chip's physical VMEM (64 MiB/TC on v7x, 128 MiB on v5e/v6e)."""
    cap = None
    try:
        info = pltpu.get_tpu_info()
        cap = getattr(info, "vmem_capacity_bytes", None)
    except Exception:
        cap = None
    if not cap:
        cap = 64 * 1024 * 1024  # conservative fallback = v7x per-TC VMEM
    budget = min((int(cap) * 3) // 4, 96 * 1024 * 1024)
    limit = min((int(cap) * 7) // 8, budget + (32 << 20))
    return int(budget), int(limit)


def _footprint(tm, tn, tk, gk, b1, b2, bo):
    # double-buffered input tiles + output tile (+ f32 accumulator if K-split)
    f = 2 * tm * tk * b1 + 2 * tn * tk * b2 + 2 * tm * tn * bo
    if gk > 1:
        f += 4 * tm * tn
    return f


# ----------------------------------------------------------------------------
# Kernels
# ----------------------------------------------------------------------------
def _matmul_nt_kernel_acc(x1_ref, x2_ref, o_ref, acc_ref):
    # x1_ref: (tm, tk), x2_ref: (tn, tk); contract last dim of both (NT is
    # MXU-native, no explicit transpose through the XLU).
    @pl.when(pl.program_id(2) == 0)
    def _():
        acc_ref[...] = jnp.zeros_like(acc_ref)

    acc_ref[...] += jax.lax.dot_general(
        x1_ref[...], x2_ref[...],
        dimension_numbers=(((1,), (1,)), ((), ())),
        preferred_element_type=jnp.float32)

    @pl.when(pl.program_id(2) == pl.num_programs(2) - 1)
    def _():
        o_ref[...] = acc_ref[...].astype(o_ref.dtype)


def _matmul_nt_kernel_fullk(x1_ref, x2_ref, o_ref):
    # Single K step: no accumulator scratch, no zero-init, no RMW traffic.
    o_ref[...] = jax.lax.dot_general(
        x1_ref[...], x2_ref[...],
        dimension_numbers=(((1,), (1,)), ((), ())),
        preferred_element_type=jnp.float32).astype(o_ref.dtype)


# ----------------------------------------------------------------------------
# Wrapper
# ----------------------------------------------------------------------------
def _pallas_matmul_nt(x1, x2, out_dtype, *, tiles=None):
    M, D = x1.shape
    N, _ = x2.shape
    b1 = jnp.dtype(x1.dtype).itemsize
    b2 = jnp.dtype(x2.dtype).itemsize
    bo = jnp.dtype(out_dtype).itemsize
    budget, vmem_limit = _vmem_budget()

    if tiles is not None:
        tm, tn, tk = tiles
        assert tm % 8 == 0 and tn % 128 == 0 and tk % 128 == 0
        M_pad = _round_up(M, tm)
        N_pad = _round_up(N, tn)
        D_pad = _round_up(D, tk)
    else:
        # Big tiles -> high arithmetic intensity (target ~T/2 flops/byte).
        if max(b1, b2) <= 2:
            tm_t, tn_t, tk_t = 1024, 1024, 2048
        else:
            tm_t, tn_t, tk_t = 512, 512, 1024

        tm, gm, M_pad = _split_dim(M, tm_t, 8)
        tn, gn, N_pad = _split_dim(N, tn_t, 128)

        # Keep >=2 parallel output blocks so both v7x TensorCores get work.
        if gm * gn == 1 and max(M, N) >= 512:
            if M >= N:
                tm, gm, M_pad = _split_dim(M, _round_up(_cdiv(M, 2), 8), 8)
            else:
                tn, gn, N_pad = _split_dim(N, _round_up(_cdiv(N, 2), 128), 128)

        # K tiling: prefer a single full-K step (kills accumulator RMW and
        # per-K-step pipeline overhead) when it fits the VMEM budget.
        D_pad0 = _round_up(D, 128)
        if _footprint(tm, tn, D_pad0, 1, b1, b2, bo) <= budget:
            tk, D_pad = D_pad0, D_pad0
        else:
            tk, gk, D_pad = _split_dim(D_pad0, tk_t, 128)
            while _footprint(tm, tn, tk, gk, b1, b2, bo) > budget and tk > 128:
                tk, gk, D_pad = _split_dim(D_pad0, max(128, tk // 2), 128)
            while _footprint(tm, tn, tk, gk, b1, b2, bo) > budget and tn > 128:
                tn, gn, N_pad = _split_dim(N, max(128, tn // 2), 128)
            while _footprint(tm, tn, tk, gk, b1, b2, bo) > budget and tm > 8:
                tm, gm, M_pad = _split_dim(M, max(8, tm // 2), 8)

    gm, gn, gk = M_pad // tm, N_pad // tn, D_pad // tk

    # Zero padding along K is numerically exact; M/N padding lands only in
    # rows/cols that are sliced away.  Only materialize a pad when needed.
    # TODO(synk): mask the K tail / M-N edges in-kernel to avoid the extra
    # jnp.pad and output-slice HBM passes for badly aligned shapes.
    x1p = x1 if (M_pad == M and D_pad == D) else jnp.pad(
        x1, ((0, M_pad - M), (0, D_pad - D)))
    x2p = x2 if (N_pad == N and D_pad == D) else jnp.pad(
        x2, ((0, N_pad - N), (0, D_pad - D)))

    bytes_accessed = (x1p.size * b1 + x2p.size * b2 + M_pad * N_pad * bo)
    cost = pl.CostEstimate(flops=2 * M_pad * N_pad * D_pad,
                           transcendentals=0,
                           bytes_accessed=bytes_accessed)
    out_shape = jax.ShapeDtypeStruct((M_pad, N_pad), out_dtype)

    if gk == 1:
        out_p = pl.pallas_call(
            _matmul_nt_kernel_fullk,
            out_shape=out_shape,
            grid_spec=pltpu.PrefetchScalarGridSpec(
                num_scalar_prefetch=0,
                grid=(gm, gn),
                in_specs=[
                    pl.BlockSpec((tm, tk), lambda i, j: (i, 0)),   # x1 tile
                    pl.BlockSpec((tn, tk), lambda i, j: (j, 0)),   # x2 tile (NT)
                ],
                out_specs=pl.BlockSpec((tm, tn), lambda i, j: (i, j)),
            ),
            compiler_params=pltpu.CompilerParams(
                dimension_semantics=("parallel", "parallel"),
                vmem_limit_bytes=vmem_limit),
            cost_estimate=cost,
        )(x1p, x2p)
    else:
        out_p = pl.pallas_call(
            _matmul_nt_kernel_acc,
            out_shape=out_shape,
            grid_spec=pltpu.PrefetchScalarGridSpec(
                num_scalar_prefetch=0,
                grid=(gm, gn, gk),
                in_specs=[
                    pl.BlockSpec((tm, tk), lambda i, j, k: (i, k)),
                    pl.BlockSpec((tn, tk), lambda i, j, k: (j, k)),
                ],
                out_specs=pl.BlockSpec((tm, tn), lambda i, j, k: (i, j)),
                scratch_shapes=[pltpu.VMEM((tm, tn), jnp.float32)],
            ),
            compiler_params=pltpu.CompilerParams(
                dimension_semantics=("parallel", "parallel", "arbitrary"),
                vmem_limit_bytes=vmem_limit),
            cost_estimate=cost,
        )(x1p, x2p)

    if M_pad != M or N_pad != N:
        out_p = out_p[:M, :N]
    return out_p


def linear_kernel(x1, x2=None, *, force_pallas=False):
    """Pallas equivalent of LinearKernel.forward: x1 @ x2.T (x2 defaults to x1)."""
    if x2 is None:
        x2 = x1
    assert x1.ndim == 2 and x2.ndim == 2, "expected 2-D inputs (M,D) and (N,D)"
    assert x1.shape[1] == x2.shape[1], "inner dims must match"

    M, D = x1.shape
    N, _ = x2.shape
    out_dtype = jnp.result_type(x1.dtype, x2.dtype)

    # Tiny problems: grid-step overhead + padding dwarfs the FLOPs; let XLA's
    # fused matmul handle them.
    if not force_pallas and (M * N * D) < (128 * 128 * 128):
        return jax.lax.dot_general(
            x1, x2, (((1,), (1,)), ((), ())),
            preferred_element_type=jnp.float32).astype(out_dtype)

    # TODO(synk): for the x2-is-x1 (Gram) case, computing only j>=i tiles and
    # mirroring would halve MXU work and HBM reads; not implemented here.
    return _pallas_matmul_nt(x1, x2, out_dtype)


# ----------------------------------------------------------------------------
# Self-test
# ----------------------------------------------------------------------------
if __name__ == "__main__":
    key = jax.random.PRNGKey(0)
    k1, k2, k3, k4, k5, k6 = jax.random.split(key, 6)

    # --- Small shapes (forced through the Pallas path to exercise the kernel) ---
    x1 = jax.random.normal(k1, (8, 32), dtype=jnp.float32)
    x2 = jax.random.normal(k2, (16, 32), dtype=jnp.float32)

    out = linear_kernel(x1, x2, force_pallas=True)
    jax.block_until_ready(out)
    ref = x1 @ x2.T
    assert out.shape == (8, 16)
    assert jnp.allclose(out, ref, atol=1e-5, rtol=1e-5)

    # x2 defaults to x1 (Gram matrix)
    out_self = linear_kernel(x1, force_pallas=True)
    jax.block_until_ready(out_self)
    ref_self = x1 @ x1.T
    assert out_self.shape == (8, 8)
    assert jnp.allclose(out_self, ref_self, atol=1e-5, rtol=1e-5)

    # Auto-dispatch path for tiny shapes (falls back to XLA matmul)
    out_auto = linear_kernel(x1, x2)
    jax.block_until_ready(out_auto)
    assert jnp.allclose(out_auto, ref, atol=1e-5, rtol=1e-5)

    # --- Larger bf16 shapes: exercises the full-K (no-accumulator) fast path
    #     plus the >=2-parallel-blocks split for dual-TensorCore chips. ---
    a = jax.random.normal(k3, (512, 1024), dtype=jnp.bfloat16)
    b = jax.random.normal(k4, (384, 1024), dtype=jnp.bfloat16)
    out_big = linear_kernel(a, b)
    jax.block_until_ready(out_big)
    ref_big = jnp.dot(a.astype(jnp.float32), b.astype(jnp.float32).T)
    assert out_big.shape == (512, 384)
    assert jnp.allclose(out_big.astype(jnp.float32), ref_big, atol=0.5, rtol=1e-2)

    # --- Forced K-split tiles: exercises the accumulator kernel + N padding ---
    c = jax.random.normal(k5, (256, 512), dtype=jnp.float32)
    d = jax.random.normal(k6, (192, 512), dtype=jnp.float32)
    out_k = _pallas_matmul_nt(c, d, jnp.float32, tiles=(128, 128, 256))
    jax.block_until_ready(out_k)
    ref_k = c @ d.T
    assert out_k.shape == (256, 192)
    assert jnp.allclose(out_k, ref_k, atol=1e-3, rtol=1e-4)

    print("KERNEL_OK")
</pallas_src>

<mosaic_0001>
module attributes {stable_mosaic.version = 11 : i64} {
  func.func @_matmul_nt_kernel_fullk(%arg0: i32, %arg1: i32, %arg2: memref<8x128xf32, #tpu.memory_space<vmem>>, %arg3: memref<128x128xf32, #tpu.memory_space<vmem>>, %arg4: memref<8x128xf32, #tpu.memory_space<vmem>>) attributes {dimension_semantics = [#tpu.dimension_semantics<parallel>, #tpu.dimension_semantics<parallel>], iteration_bounds = array<i64: 1, 1>, scalar_prefetch = 0 : i64, scratch_operands = 0 : i64, tpu.core_type = #tpu.core_type<tc>, window_params = [{transform_indices = @transform_0, window_bounds = array<i64: 8, 128>}, {transform_indices = @transform_1, window_bounds = array<i64: 128, 128>}, {transform_indices = @transform_2, window_bounds = array<i64: 8, 128>}]} {
    %c0 = arith.constant 0 : index
    %c0_0 = arith.constant 0 : index
    %0 = vector.load %arg2[%c0, %c0_0] : memref<8x128xf32, #tpu.memory_space<vmem>>, vector<8x128xf32>
    %c0_1 = arith.constant 0 : index
    %c0_2 = arith.constant 0 : index
    %1 = vector.load %arg3[%c0_1, %c0_2] : memref<128x128xf32, #tpu.memory_space<vmem>>, vector<128x128xf32>
    %cst = arith.constant dense<0.000000e+00> : vector<8x128xf32>
    %2 = tpu.matmul %0, %1, %cst {dimension_numbers = #tpu.dot_dimension_numbers<[1], [1], [0], [0], [0, 0, 1, 0], [], []>} : vector<8x128xf32>, vector<128x128xf32>, vector<8x128xf32> -> vector<8x128xf32>
    %c0_3 = arith.constant 0 : index
    %c0_4 = arith.constant 0 : index
    %3 = vector.load %arg4[%c0_3, %c0_4] : memref<8x128xf32, #tpu.memory_space<vmem>>, vector<8x128xf32>
    tpu.vector_store %arg4[%c0_3, %c0_4], %2 {strides = array<i32>} : memref<8x128xf32, #tpu.memory_space<vmem>>, vector<8x128xf32>,
    return
  }
  func.func @transform_0(%arg0: i32, %arg1: i32) -> (i32, i32) {
    %c0_i32 = arith.constant 0 : i32
    %c0_i32_0 = arith.constant 0 : i32
    return %arg0, %c0_i32 : i32, i32
  }
  func.func @transform_1(%arg0: i32, %arg1: i32) -> (i32, i32) {
    %c0_i32 = arith.constant 0 : i32
    %c0_i32_0 = arith.constant 0 : i32
    return %arg1, %c0_i32 : i32, i32
  }
  func.func @transform_2(%arg0: i32, %arg1: i32) -> (i32, i32) {
    %c0_i32 = arith.constant 0 : i32
    return %arg0, %arg1 : i32, i32
  }
}

</mosaic_0001>

<llo_original>
// kernel: tpu_custom_call.1
$region0: #{tpu_custom_call.1}
  #allocation0 [shape = 'u32[]', space=smem, size = 0x4, offset = 0x4, fixed_abs, tag = 'smem constant byte address 0x4 - core index']
  #allocation1 [shape = 'u32[72,128]{1,0:T(1,128)}', space=vmem, size = 0x9000, scoped, tag = 'internal scratch']
  %s0 = inlined_call_operand.hbm [shape: f32[8,128], index: 0, kind: input, shape index: {}]
  %s1 = inlined_call_operand.hbm [shape: f32[128,128], index: 1, kind: input, shape index: {}]
  %s2 = inlined_call_operand.hbm [shape: f32[8,128], index: 2, kind: output, shape index: {}]
  %s3 = sld [smem:[#allocation0]]
  $region26: #{tpu_custom_call.1} parent=0
    _
  %s5 = ssub.s32 1, %s3
  %s6 = scalar_select 0, %s5, %s3
  $region1: #{tpu_custom_call.1} parent=0
    #allocation2 [shape = 'u8[4096]{0}', space=vmem, size = 0x1000, scoped, tag = 'input window, operand 0, single buffered']
    #allocation3 [shape = 's32[1]{0}', space=sflag, size = 0x4, scoped, tag = 'scoped memory for tpu_custom_call.1']
    #allocation4 [shape = 's32[1]{0}', space=sflag, size = 0x4, scoped, tag = 'scoped memory for tpu_custom_call.1']
    #allocation5 [shape = 'u8[65536]{0}', space=vmem, size = 0x10000, scoped, tag = 'input window, operand 1, single buffered']
    #allocation6 [shape = 's32[1]{0}', space=sflag, size = 0x4, scoped, tag = 'scoped memory for tpu_custom_call.1']
    #allocation7 [shape = 'u8[4096]{0}', space=vmem, size = 0x1000, scoped, tag = 'output window, operand 0, single buffered']
    %7 = vsyncpa [#allocation3], 0
    %8 = vsyncpa [#allocation6], 0
    %9 = vsyncpa [#allocation4], 0
    // Predicated region
    $region2: #{tpu_custom_call.1} parent=1 // pred_check
      _
    $region3: #{tpu_custom_call.1} parent=1 // pred_check_branch
      %11 = sbr.rel (0) target = $region5
    $region4: #{tpu_custom_call.1} parent=1 // pred_region
      %13 = vsyncadd [#allocation3], 0
      %s15 = sshll.u32 %s0, 4
      %s16 = int_to_ptr.hbm [resolvable:$true] %s15
      %s17 = sshll.u32 [#allocation2], 4
      %s18 = int_to_ptr.vmem [resolvable:$true] %s17
      %20 = dma.hbm_to_vmem [thread:$0]  %s16, 128, %s18, [#allocation3]
    $region5: #{tpu_custom_call.1} parent=1 // pred_fallthru
      _
    // Predicated region
    $region6: #{tpu_custom_call.1} parent=1 // pred_check
      _
    $region7: #{tpu_custom_call.1} parent=1 // pred_check_branch
      %22 = sbr.rel (0) target = $region9
    $region8: #{tpu_custom_call.1} parent=1 // pred_region
      %24 = vsyncadd [#allocation6], 0
      %s25 = sshll.u32 %s1, 4
      %s26 = int_to_ptr.hbm [resolvable:$true] %s25
      %s27 = sshll.u32 [#allocation5], 4
      %s28 = int_to_ptr.vmem [resolvable:$true] %s27
      %33 = dma.hbm_to_vmem [thread:$0]  %s26, 2048, %s28, [#allocation6], 128, 128, 8
    $region9: #{tpu_custom_call.1} parent=1 // pred_fallthru
      _
    // Predicated region
    $region10: #{tpu_custom_call.1} parent=1 // pred_check
      _
    $region11: #{tpu_custom_call.1} parent=1 // pred_check_branch
      %35 = sbr.rel (0) target = $region13
    $region12: #{tpu_custom_call.1} parent=1 // pred_region
      %37 = dma.done [#allocation3], 128
    $region13: #{tpu_custom_call.1} parent=1 // pred_fallthru
      _
    // Predicated region
    $region14: #{tpu_custom_call.1} parent=1 // pred_check
      _
    $region15: #{tpu_custom_call.1} parent=1 // pred_check_branch
      %39 = sbr.rel (0) target = $region17
    $region16: #{tpu_custom_call.1} parent=1 // pred_region
      %41 = dma.done [#allocation6], 2048
    $region17: #{tpu_custom_call.1} parent=1 // pred_fallthru
      _
    %v42 = vld [vmem:[#allocation2] sm:$0xff]
    %v43 = vld [vmem:[#allocation5] sm:$0xff]
    %v44 = vld [vmem:[#allocation5 + $0x8] sm:$0xff]
    %v45 = vld [vmem:[#allocation5 + $0x10] sm:$0xff]
    %v46 = vld [vmem:[#allocation5 + $0x18] sm:$0xff]
    %v47 = vld [vmem:[#allocation5 + $0x20] sm:$0xff]
    %v48 = vld [vmem:[#allocation5 + $0x28] sm:$0xff]
    %v49 = vld [vmem:[#allocation5 + $0x30] sm:$0xff]
    %v50 = vld [vmem:[#allocation5 + $0x38] sm:$0xff]
    %v51 = vld [vmem:[#allocation5 + $0x40] sm:$0xff]
    %v52 = vld [vmem:[#allocation5 + $0x48] sm:$0xff]
    %v53 = vld [vmem:[#allocation5 + $0x50] sm:$0xff]
    %v54 = vld [vmem:[#allocation5 + $0x58] sm:$0xff]
    %v55 = vld [vmem:[#allocation5 + $0x60] sm:$0xff]
    %v56 = vld [vmem:[#allocation5 + $0x68] sm:$0xff]
    %v57 = vld [vmem:[#allocation5 + $0x70] sm:$0xff]
    %v58 = vld [vmem:[#allocation5 + $0x78] sm:$0xff]
    %59 = vmatpush.xpose.msra.mxu0 %v58
    %60 = vmatpush.xpose.msra.mxu0 %v57
    %61 = vmatpush.xpose.msra.mxu0 %v56
    %62 = vmatpush.xpose.msra.mxu0 %v55
    %63 = vmatpush.xpose.msra.mxu0 %v54
    %64 = vmatpush.xpose.msra.mxu0 %v53
    %65 = vmatpush.xpose.msra.mxu0 %v52
    %66 = vmatpush.xpose.msra.mxu0 %v51
    %67 = vmatpush.xpose.msra.mxu0 %v50
    %68 = vmatpush.xpose.msra.mxu0 %v49
    %69 = vmatpush.xpose.msra.mxu0 %v48
    %70 = vmatpush.xpose.msra.mxu0 %v47
    %71 = vmatpush.xpose.msra.mxu0 %v46
    %72 = vmatpush.xpose.msra.mxu0 %v45
    %73 = vmatpush.xpose.msra.mxu0 %v44
    %74 = vmatpush.xpose.msra.mxu0 %v43
    %75 = vmatmul.f32.gmra.mxu0 %v42
    %v76 = vpop.f32.mrf.mxu0
    %v77 = vadd.f32 0.0, %v76
    %78 = vdwg.mxu0
    %79 = vst [vmem:[#allocation7] sm:$0xff] %v77
    // Predicated region
    $region18: #{tpu_custom_call.1} parent=1 // pred_check
      _
    $region19: #{tpu_custom_call.1} parent=1 // pred_check_branch
      %81 = sbr.rel (0) target = $region21
    $region20: #{tpu_custom_call.1} parent=1 // pred_region
      %83 = vsyncadd [#allocation4], 0
      %s85 = sshll.u32 [#allocation7], 4
      %s86 = int_to_ptr.vmem [resolvable:$true] %s85
      %s87 = sshll.u32 %s2, 4
      %s88 = int_to_ptr.hbm [resolvable:$true] %s87
      %90 = dma.vmem_to_hbm [thread:$0]  %s86, 128, %s88, [#allocation4]
    $region21: #{tpu_custom_call.1} parent=1 // pred_fallthru
      _
    // Predicated region
    $region22: #{tpu_custom_call.1} parent=1 // pred_check
      _
    $region23: #{tpu_custom_call.1} parent=1 // pred_check_branch
      %92 = sbr.rel (0) target = $region25
    $region24: #{tpu_custom_call.1} parent=1 // pred_region
      %94 = dma.done [#allocation4], 128
    $region25: #{tpu_custom_call.1} parent=1 // pred_fallthru
      _
    %95 = vsyncpa [#allocation3], 1
    %96 = vsyncpa [#allocation6], 1
    %97 = vsyncpa [#allocation4], 1

</llo_original>
